<compile_context>
chip_gen: v5e
topology: v5e:2x2
jax: 0.10.0
libtpu: 0.0.40
codegen_flags: <defaults>
</compile_context>

<pallas_src>
import jax
import jax.numpy as jnp
from jax import lax
from jax.experimental import pallas as pl
from jax.experimental.pallas import tpu as pltpu

_BN_EPS = 1e-5


def _bn_relu(h):
    """Training-mode BatchNorm1d (biased var, gamma=1, beta=0, eps=1e-5) + ReLU.

    One-pass statistics (sum and sum-of-squares co-issue); var clamped at 0
    to guard against f32 cancellation for near-constant columns.
    """
    inv_n = 1.0 / h.shape[0]
    mean = jnp.sum(h, axis=0, keepdims=True) * inv_n
    mean_sq = jnp.sum(h * h, axis=0, keepdims=True) * inv_n
    var = jnp.maximum(mean_sq - mean * mean, 0.0)
    return jnp.maximum((h - mean) * lax.rsqrt(var + _BN_EPS), 0.0)


# --------------------------------------------------------------------------
# Single forward step (module semantics): whole problem resident in VMEM,
# one kernel invocation, no grid.
# --------------------------------------------------------------------------
def _recursive_repr_kernel(x_ref, w1_ref, w2_ref, o_ref):
    x = x_ref[...].astype(jnp.bfloat16)                    # MXU-native operands
    h = _bn_relu(jnp.dot(x, w1_ref[...], preferred_element_type=jnp.float32))
    y = _bn_relu(jnp.dot(h.astype(jnp.bfloat16), w2_ref[...],
                         preferred_element_type=jnp.float32))
    o_ref[...] = jnp.tanh(y)                               # * 1.0 is a no-op


@jax.jit
def recursive_representation_forward(obs_state_encoding, w1_bf16, w2_bf16):
    """obs_state_encoding: (B, observation_shape + latent_state_dim) f32.

    Weights are passed pre-cast to bf16 (done once at init time).  The Linear
    biases are omitted: with training-mode BN directly after each Linear,
    (xW + b) - mean(xW + b) == xW - mean(xW), so the bias is exactly a no-op
    (and the module zero-inits it anyway).
    """
    B = obs_state_encoding.shape[0]
    latent_dim = w2_bf16.shape[1]
    vmem = pl.BlockSpec(memory_space=pltpu.MemorySpace.VMEM)
    return pl.pallas_call(
        _recursive_repr_kernel,
        out_shape=jax.ShapeDtypeStruct((B, latent_dim), jnp.float32),
        in_specs=[vmem, vmem, vmem],
        out_specs=vmem,
    )(obs_state_encoding, w1_bf16, w2_bf16)


# --------------------------------------------------------------------------
# Fused K-step recursion: ONE pallas_call, NO grid.  Everything (obs_seq,
# weights, latent state) is VMEM-resident; the K-step loop runs in-kernel.
# x_k = concat(obs_k, latent_{k-1}) is realized as the split matmul
# obs @ W1[:obs_dim] + latent @ W1[obs_dim:]; the obs half is hoisted out of
# the loop as one (K*B, obs_dim) @ (obs_dim, hidden) matmul into scratch.
# --------------------------------------------------------------------------
def _rollout_kernel(obs_ref, lat0_ref, w1o_ref, w1l_ref, w2_ref,
                    out_ref, pre_ref):
    B, _ = lat0_ref.shape
    K = out_ref.shape[0] // B

    # Hoist the observation path off the serial critical path: one
    # (K*B, obs_dim) x (obs_dim, hidden) matmul, done before the recursion.
    pre_ref[...] = jnp.dot(obs_ref[...].astype(jnp.bfloat16), w1o_ref[...],
                           preferred_element_type=jnp.float32)

    def step(k, lat):
        row = pl.multiple_of(k * B, B)         # sublane-aligned (B == 8)
        pre = pre_ref[pl.ds(row, B), :] + jnp.dot(
            lat.astype(jnp.bfloat16), w1l_ref[...],
            preferred_element_type=jnp.float32)
        h = _bn_relu(pre)
        y = _bn_relu(jnp.dot(h.astype(jnp.bfloat16), w2_ref[...],
                             preferred_element_type=jnp.float32))
        new_lat = jnp.tanh(y)
        out_ref[pl.ds(row, B), :] = new_lat    # VMEM store; one HBM writeback
        return new_lat

    lax.fori_loop(0, K, step, lat0_ref[...], unroll=True)


@jax.jit
def recursive_representation_rollout(obs_seq, latent0,
                                     w1_obs_bf16, w1_lat_bf16, w2_bf16):
    """Apply the recursive representation network K times in one pallas_call.

    obs_seq: (K, B, observation_shape) f32, latent0: (B, latent_dim) f32.
    Weight slices are pre-cast bf16 (done once at init).  Returns all K new
    latent states, shape (K, B, latent_dim) f32.
    """
    K, B, obs_dim = obs_seq.shape
    latent_dim = latent0.shape[1]
    hidden = w1_obs_bf16.shape[1]
    vmem = pl.BlockSpec(memory_space=pltpu.MemorySpace.VMEM)
    out = pl.pallas_call(
        _rollout_kernel,
        out_shape=jax.ShapeDtypeStruct((K * B, latent_dim), jnp.float32),
        in_specs=[vmem, vmem, vmem, vmem, vmem],
        out_specs=vmem,
        scratch_shapes=[pltpu.VMEM((K * B, hidden), jnp.float32)],
    )(obs_seq.reshape(K * B, obs_dim), latent0,
      w1_obs_bf16, w1_lat_bf16, w2_bf16)
    return out.reshape(K, B, latent_dim)


# --------------------------------------------------------------------------
# References (pure JAX), same bf16 matmul operands / f32 accumulate.
# --------------------------------------------------------------------------
def _reference_forward(x, w1, b1, w2, b2):
    def lin(a, w, b):
        return jnp.dot(a.astype(jnp.bfloat16), w.astype(jnp.bfloat16),
                       preferred_element_type=jnp.float32) + b
    h = lin(x, w1, b1)
    h = jnp.maximum((h - jnp.mean(h, 0)) / jnp.sqrt(jnp.var(h, 0) + _BN_EPS), 0.0)
    y = lin(h, w2, b2)
    y = jnp.maximum((y - jnp.mean(y, 0)) / jnp.sqrt(jnp.var(y, 0) + _BN_EPS), 0.0)
    return jnp.tanh(y)


def _reference_rollout(obs_seq, latent0, w1, w2):
    zb1 = jnp.zeros((w1.shape[1],), jnp.float32)
    zb2 = jnp.zeros((w2.shape[1],), jnp.float32)

    def step(lat, obs):
        x = jnp.concatenate([obs, lat], axis=-1)
        new_lat = _reference_forward(x, w1, zb1, w2, zb2)
        return new_lat, new_lat

    _, outs = jax.lax.scan(step, latent0, obs_seq)
    return outs


def _xavier_uniform(key, fan_in, fan_out, gain=0.5):
    bound = gain * (6.0 / (fan_in + fan_out)) ** 0.5
    # stored as (in, out) so the kernel computes x @ W (== x @ W_pt.T)
    return jax.random.uniform(
        key, (fan_in, fan_out), minval=-bound, maxval=bound, dtype=jnp.float32
    )


if __name__ == "__main__":
    observation_shape = 24
    latent_state_dim = 8
    hidden_channels = 32
    batch = 8
    rollout_len = 5
    input_dim = observation_shape + latent_state_dim  # 32

    key = jax.random.PRNGKey(0)
    k_x, k_w1, k_w2, k_obs, k_lat = jax.random.split(key, 5)

    obs_state_encoding = jax.random.normal(
        k_x, (batch, input_dim), dtype=jnp.float32)
    w1 = _xavier_uniform(k_w1, input_dim, hidden_channels, gain=0.5)
    b1 = jnp.zeros((hidden_channels,), dtype=jnp.float32)
    w2 = _xavier_uniform(k_w2, hidden_channels, latent_state_dim, gain=0.5)
    b2 = jnp.zeros((latent_state_dim,), dtype=jnp.float32)

    # Pre-cast / pre-slice weights to bf16 ONCE (parameter-init time); no
    # per-call convert or slice ops in the hot path.
    w1_bf16 = w1.astype(jnp.bfloat16)
    w2_bf16 = w2.astype(jnp.bfloat16)
    w1_obs_bf16 = w1_bf16[:observation_shape]
    w1_lat_bf16 = w1_bf16[observation_shape:]

    # --- single forward step (module semantics) ---
    out = recursive_representation_forward(obs_state_encoding, w1_bf16, w2_bf16)
    out = jax.block_until_ready(out)
    ref = _reference_forward(obs_state_encoding, w1, b1, w2, b2)
    assert out.shape == (batch, latent_state_dim)
    assert jnp.allclose(out, ref, atol=2e-4, rtol=2e-4), \
        float(jnp.max(jnp.abs(out - ref)))

    # --- fused K-step recursion (no grid, obs matmul hoisted off the chain) ---
    obs_seq = jax.random.normal(
        k_obs, (rollout_len, batch, observation_shape), dtype=jnp.float32)
    latent0 = jnp.tanh(
        jax.random.normal(k_lat, (batch, latent_state_dim), dtype=jnp.float32))
    outs = recursive_representation_rollout(
        obs_seq, latent0, w1_obs_bf16, w1_lat_bf16, w2_bf16)
    outs = jax.block_until_ready(outs)
    refs = _reference_rollout(obs_seq, latent0, w1, w2)
    assert outs.shape == (rollout_len, batch, latent_state_dim)
    assert jnp.allclose(outs, refs, atol=5e-4, rtol=5e-4), \
        float(jnp.max(jnp.abs(outs - refs)))

    print("KERNEL_OK")
</pallas_src>

<mosaic_0001>
module attributes {stable_mosaic.version = 11 : i64} {
  func.func @_recursive_repr_kernel(%arg0: memref<8x32xf32, #tpu.memory_space<vmem>>, %arg1: memref<32x32xbf16, #tpu.memory_space<vmem>>, %arg2: memref<32x8xbf16, #tpu.memory_space<vmem>>, %arg3: memref<8x8xf32, #tpu.memory_space<vmem>>) attributes {dimension_semantics = [], scalar_prefetch = 0 : i64, scratch_operands = 0 : i64, tpu.core_type = #tpu.core_type<tc>} {
    %c0 = arith.constant 0 : index
    %c0_0 = arith.constant 0 : index
    %0 = vector.load %arg0[%c0, %c0_0] : memref<8x32xf32, #tpu.memory_space<vmem>>, vector<8x32xf32>
    %1 = arith.truncf %0 : vector<8x32xf32> to vector<8x32xbf16>
    %c0_1 = arith.constant 0 : index
    %c0_2 = arith.constant 0 : index
    %2 = vector.load %arg1[%c0_1, %c0_2] : memref<32x32xbf16, #tpu.memory_space<vmem>>, vector<32x32xbf16>
    %cst = arith.constant dense<0.000000e+00> : vector<8x32xf32>
    %3 = tpu.matmul %1, %2, %cst {dimension_numbers = #tpu.dot_dimension_numbers<[1], [0], [0], [1], [0, 0, 1, 1], [], []>} : vector<8x32xbf16>, vector<32x32xbf16>, vector<8x32xf32> -> vector<8x32xf32>
    %cst_3 = arith.constant dense<0.000000e+00> : vector<32xf32>
    %4 = vector.multi_reduction <add>, %3, %cst_3 [0] : vector<8x32xf32> to vector<32xf32>
    %5 = vector.shape_cast %4 : vector<32xf32> to vector<1x32xf32>
    %cst_4 = arith.constant 1.250000e-01 : f32
    %6 = vector.broadcast %cst_4 : f32 to vector<1x32xf32>
    %7 = arith.mulf %5, %6 : vector<1x32xf32>
    %8 = arith.mulf %3, %3 : vector<8x32xf32>
    %cst_5 = arith.constant dense<0.000000e+00> : vector<32xf32>
    %9 = vector.multi_reduction <add>, %8, %cst_5 [0] : vector<8x32xf32> to vector<32xf32>
    %10 = vector.shape_cast %9 : vector<32xf32> to vector<1x32xf32>
    %cst_6 = arith.constant 1.250000e-01 : f32
    %11 = vector.broadcast %cst_6 : f32 to vector<1x32xf32>
    %12 = arith.mulf %10, %11 : vector<1x32xf32>
    %13 = arith.mulf %7, %7 : vector<1x32xf32>
    %14 = arith.subf %12, %13 : vector<1x32xf32>
    %cst_7 = arith.constant 0.000000e+00 : f32
    %15 = vector.broadcast %cst_7 : f32 to vector<1x32xf32>
    %16 = arith.maximumf %14, %15 : vector<1x32xf32>
    %17 = vector.broadcast %7 : vector<1x32xf32> to vector<8x32xf32>
    %18 = arith.subf %3, %17 : vector<8x32xf32>
    %cst_8 = arith.constant 9.99999974E-6 : f32
    %19 = vector.broadcast %cst_8 : f32 to vector<1x32xf32>
    %20 = arith.addf %16, %19 : vector<1x32xf32>
    %21 = math.rsqrt %20 : vector<1x32xf32>
    %22 = vector.broadcast %21 : vector<1x32xf32> to vector<8x32xf32>
    %23 = arith.mulf %18, %22 : vector<8x32xf32>
    %cst_9 = arith.constant 0.000000e+00 : f32
    %24 = vector.broadcast %cst_9 : f32 to vector<8x32xf32>
    %25 = arith.maximumf %23, %24 : vector<8x32xf32>
    %26 = arith.truncf %25 : vector<8x32xf32> to vector<8x32xbf16>
    %c0_10 = arith.constant 0 : index
    %c0_11 = arith.constant 0 : index
    %27 = vector.load %arg2[%c0_10, %c0_11] : memref<32x8xbf16, #tpu.memory_space<vmem>>, vector<32x8xbf16>
    %cst_12 = arith.constant dense<0.000000e+00> : vector<8x8xf32>
    %28 = tpu.matmul %26, %27, %cst_12 {dimension_numbers = #tpu.dot_dimension_numbers<[1], [0], [0], [1], [0, 0, 1, 1], [], []>} : vector<8x32xbf16>, vector<32x8xbf16>, vector<8x8xf32> -> vector<8x8xf32>
    %cst_13 = arith.constant dense<0.000000e+00> : vector<8xf32>
    %29 = vector.multi_reduction <add>, %28, %cst_13 [0] : vector<8x8xf32> to vector<8xf32>
    %30 = vector.shape_cast %29 : vector<8xf32> to vector<1x8xf32>
    %cst_14 = arith.constant 1.250000e-01 : f32
    %31 = vector.broadcast %cst_14 : f32 to vector<1x8xf32>
    %32 = arith.mulf %30, %31 : vector<1x8xf32>
    %33 = arith.mulf %28, %28 : vector<8x8xf32>
    %cst_15 = arith.constant dense<0.000000e+00> : vector<8xf32>
    %34 = vector.multi_reduction <add>, %33, %cst_15 [0] : vector<8x8xf32> to vector<8xf32>
    %35 = vector.shape_cast %34 : vector<8xf32> to vector<1x8xf32>
    %cst_16 = arith.constant 1.250000e-01 : f32
    %36 = vector.broadcast %cst_16 : f32 to vector<1x8xf32>
    %37 = arith.mulf %35, %36 : vector<1x8xf32>
    %38 = arith.mulf %32, %32 : vector<1x8xf32>
    %39 = arith.subf %37, %38 : vector<1x8xf32>
    %cst_17 = arith.constant 0.000000e+00 : f32
    %40 = vector.broadcast %cst_17 : f32 to vector<1x8xf32>
    %41 = arith.maximumf %39, %40 : vector<1x8xf32>
    %42 = vector.broadcast %32 : vector<1x8xf32> to vector<8x8xf32>
    %43 = arith.subf %28, %42 : vector<8x8xf32>
    %cst_18 = arith.constant 9.99999974E-6 : f32
    %44 = vector.broadcast %cst_18 : f32 to vector<1x8xf32>
    %45 = arith.addf %41, %44 : vector<1x8xf32>
    %46 = math.rsqrt %45 : vector<1x8xf32>
    %47 = vector.broadcast %46 : vector<1x8xf32> to vector<8x8xf32>
    %48 = arith.mulf %43, %47 : vector<8x8xf32>
    %cst_19 = arith.constant 0.000000e+00 : f32
    %49 = vector.broadcast %cst_19 : f32 to vector<8x8xf32>
    %50 = arith.maximumf %48, %49 : vector<8x8xf32>
    %51 = math.tanh %50 : vector<8x8xf32>
    %c0_20 = arith.constant 0 : index
    %c0_21 = arith.constant 0 : index
    %52 = vector.load %arg3[%c0_20, %c0_21] : memref<8x8xf32, #tpu.memory_space<vmem>>, vector<8x8xf32>
    tpu.vector_store %arg3[%c0_20, %c0_21], %51 {strides = array<i32>} : memref<8x8xf32, #tpu.memory_space<vmem>>, vector<8x8xf32>,
    return
  }
}

</mosaic_0001>

<llo_original>
// kernel: recursive_representation_forward.1
$region0: #{recursive_representation_forward.1}
  #allocation0 [shape = 'u32[]', space=smem, size = 0x4, offset = 0x4, fixed_abs, tag = 'smem constant byte address 0x4 - core index']
  #allocation1 [shape = 'u32[72,128]{1,0:T(1,128)}', space=vmem, size = 0x9000, scoped, tag = 'internal scratch']
  %s0 = inlined_call_operand.hbm [shape: f32[8,32], index: 0, kind: input, shape index: {}]
  %s1 = inlined_call_operand.vmem [shape: bf16[32,32], index: 1, kind: input, shape index: {}]
  %s2 = inlined_call_operand.vmem [shape: bf16[32,8], index: 2, kind: input, shape index: {}]
  %s3 = inlined_call_operand.hbm [shape: f32[8,8], index: 3, kind: output, shape index: {}]
  %s4 = sld [smem:[#allocation0]]
  $region26: #{recursive_representation_forward.1} parent=0
    _
  %s6 = ssub.s32 1, %s4
  %s7 = scalar_select 0, %s6, %s4
  $region1: #{recursive_representation_forward.1} parent=0
    #allocation2 [shape = 'u8[4096]{0}', space=vmem, size = 0x1000, scoped, tag = 'input window, operand 0, single buffered']
    #allocation3 [shape = 's32[1]{0}', space=sflag, size = 0x4, scoped, tag = 'scoped memory for recursive_representation_forward.1']
    #allocation4 [shape = 's32[1]{0}', space=sflag, size = 0x4, scoped, tag = 'scoped memory for recursive_representation_forward.1']
    #allocation5 [shape = 'u8[4096]{0}', space=vmem, size = 0x1000, scoped, tag = 'output window, operand 0, single buffered']
    %8 = vsyncpa [#allocation3], 0
    %9 = vsyncpa [#allocation4], 0
    // Predicated region
    $region2: #{recursive_representation_forward.1} parent=1 // pred_check
      _
    $region3: #{recursive_representation_forward.1} parent=1 // pred_check_branch
      %11 = sbr.rel (0) target = $region5
    $region4: #{recursive_representation_forward.1} parent=1 // pred_region
      %13 = vsyncadd [#allocation3], 0
      %s15 = sshll.u32 %s0, 4
      %s16 = int_to_ptr.hbm [resolvable:$true] %s15
      %s17 = sshll.u32 [#allocation2], 4
      %s18 = int_to_ptr.vmem [resolvable:$true] %s17
      %20 = dma.hbm_to_vmem [thread:$0]  %s16, 128, %s18, [#allocation3]
    $region5: #{recursive_representation_forward.1} parent=1 // pred_fallthru
      _
    // Predicated region
    $region6: #{recursive_representation_forward.1} parent=1 // pred_check
      _
    $region7: #{recursive_representation_forward.1} parent=1 // pred_check_branch
      %22 = sbr.rel (0) target = $region9
    $region8: #{recursive_representation_forward.1} parent=1 // pred_region
      _
    $region9: #{recursive_representation_forward.1} parent=1 // pred_fallthru
      _
    // Predicated region
    $region10: #{recursive_representation_forward.1} parent=1 // pred_check
      _
    $region11: #{recursive_representation_forward.1} parent=1 // pred_check_branch
      %24 = sbr.rel (0) target = $region13
    $region12: #{recursive_representation_forward.1} parent=1 // pred_region
      _
    $region13: #{recursive_representation_forward.1} parent=1 // pred_fallthru
      _
    // Predicated region
    $region14: #{recursive_representation_forward.1} parent=1 // pred_check
      _
    $region15: #{recursive_representation_forward.1} parent=1 // pred_check_branch
      %26 = sbr.rel (0) target = $region17
    $region16: #{recursive_representation_forward.1} parent=1 // pred_region
      %28 = dma.done [#allocation3], 128
    $region17: #{recursive_representation_forward.1} parent=1 // pred_fallthru
      _
    %v30 = vld [vmem:[#allocation2] sm:$0xff]
    %v31 = vpack.c.bf16 %v30, %v30
    %v32 = vld [vmem:[%s1] sm:$0xf]
    %v33 = vld [vmem:[%s1 + $0x4] sm:$0xf]
    %v34 = vld [vmem:[%s1 + $0x8] sm:$0xf]
    %v35 = vld [vmem:[%s1 + $0xc] sm:$0xf]
    %v40 = vunpack.c.l.b16 %v32
    %v41 = vunpack.c.l.b16 %v33
    %v42 = vunpack.c.l.b16 %v34
    %v43 = vunpack.c.l.b16 %v35
    %v44 = vpack.c.b16 %v41, %v40
    %v45 = vpack.c.b16 %v43, %v42
    %vm48 = vcmask 261120
    %v50 = vsel %vm48, %v31, 0
    %52 = vmatpush.bf16.msra.mxu0 0
    %53 = vmatpush.bf16.msra.mxu0 0
    %54 = vmatpush.bf16.msra.mxu0 0
    %55 = vmatpush.bf16.msra.mxu0 0
    %56 = vmatpush.bf16.msra.mxu0 0
    %57 = vmatpush.bf16.msra.mxu0 0
    %58 = vmatpush.bf16.msra.mxu0 %v45
    %59 = vmatpush.bf16.msra.mxu0 %v44
    %60 = vmatmul.bf16.gmra.mxu0 %v50
    %v61 = vpop.f32.mrf.mxu0
    %v62 = vadd.f32 0.0, %v61
    %v63 = vpop.f32.mrf.mxu0
    %64 = vdwg.mxu0
    %v65 = vsel %vm48, %v62, 0.0
    %v66 = vrot.slane %v65, 4
    %v67 = vadd.f32 %v65, %v66
    %v68 = vrot.slane %v67, 2
    %v69 = vadd.f32 %v67, %v68
    %v70 = vrot.slane %v69, 1
    %v71 = vadd.f32 %v69, %v70
    %v72 = vmul.f32 %v71, 0.125
    %v73 = vmul.f32 %v62, %v62
    %v74 = vsel %vm48, %v73, 0.0
    %v75 = vrot.slane %v74, 4
    %v76 = vadd.f32 %v74, %v75
    %v77 = vrot.slane %v76, 2
    %v78 = vadd.f32 %v76, %v77
    %v79 = vrot.slane %v78, 1
    %v80 = vadd.f32 %v78, %v79
    %v81 = vmul.f32 %v80, 0.125
    %v82 = vmul.f32 %v72, %v72
    %v83 = vsub.f32 %v81, %v82
    %v84 = vmax.f32 %v83, 0.0
    %v85 = vsub.f32 %v62, %v72
    %v86 = vadd.f32 %v84, 1e-05
    %v87 = vrsqrt.pop %v86
    %v88 = vmul.f32 %v87, %v86
    %v89 = vmul.f32 %v88, %v87
    %v90 = vmul.f32 0.5, %v89
    %v91 = vsub.f32 1.5, %v90
    %v92 = vmul.f32 %v87, %v91
    %vm93 = vweird.f32 %v86
    %vm94 = vweird.f32 %v87
    %vm95 = vmor %vm93, %vm94
    %v96 = vsel %vm95, %v87, %v92
    %v97 = vmul.f32 %v85, %v96
    %v98 = vmax.f32 %v97, 0.0
    %v99 = vpack.c.bf16 %v98, %v98
    %v100 = vld [vmem:[%s2] sm:$0xf]
    %v101 = vld [vmem:[%s2 + $0x4] sm:$0xf]
    %v102 = vld [vmem:[%s2 + $0x8] sm:$0xf]
    %v103 = vld [vmem:[%s2 + $0xc] sm:$0xf]
    %v108 = vunpack.c.l.b16 %v100
    %v109 = vunpack.c.l.b16 %v101
    %v110 = vunpack.c.l.b16 %v102
    %v111 = vunpack.c.l.b16 %v103
    %v112 = vpack.c.b16 %v109, %v108
    %v113 = vpack.c.b16 %v111, %v110
    %v117 = vsel %vm48, %v99, 0
    %119 = vmatpush.bf16.msra.mxu0 0
    %120 = vmatpush.bf16.msra.mxu0 0
    %121 = vmatpush.bf16.msra.mxu0 0
    %122 = vmatpush.bf16.msra.mxu0 0
    %123 = vmatpush.bf16.msra.mxu0 0
    %124 = vmatpush.bf16.msra.mxu0 0
    %125 = vmatpush.bf16.msra.mxu0 %v113
    %126 = vmatpush.bf16.msra.mxu0 %v112
    %127 = vmatmul.bf16.gmra.mxu0 %v117
    %v128 = vpop.f32.mrf.mxu0
    %v129 = vadd.f32 0.0, %v128
    %v130 = vpop.f32.mrf.mxu0
    %131 = vdwg.mxu0
    %vm132 = vcmask 64512
    %v133 = vsel %vm132, %v129, 0.0
    %v134 = vrot.slane %v133, 4
    %v135 = vadd.f32 %v133, %v134
    %v136 = vrot.slane %v135, 2
    %v137 = vadd.f32 %v135, %v136
    %v138 = vrot.slane %v137, 1
    %v139 = vadd.f32 %v137, %v138
    %v140 = vmul.f32 %v139, 0.125
    %v141 = vmul.f32 %v129, %v129
    %v142 = vsel %vm132, %v141, 0.0
    %v143 = vrot.slane %v142, 4
    %v144 = vadd.f32 %v142, %v143
    %v145 = vrot.slane %v144, 2
    %v146 = vadd.f32 %v144, %v145
    %v147 = vrot.slane %v146, 1
    %v148 = vadd.f32 %v146, %v147
    %v149 = vmul.f32 %v148, 0.125
    %v150 = vmul.f32 %v140, %v140
    %v151 = vsub.f32 %v149, %v150
    %v152 = vmax.f32 %v151, 0.0
    %v153 = vsub.f32 %v129, %v140
    %v154 = vadd.f32 %v152, 1e-05
    %v155 = vrsqrt.pop %v154
    %v156 = vmul.f32 %v155, %v154
    %v157 = vmul.f32 %v156, %v155
    %v158 = vmul.f32 0.5, %v157
    %v159 = vsub.f32 1.5, %v158
    %v160 = vmul.f32 %v155, %v159
    %vm161 = vweird.f32 %v154
    %vm162 = vweird.f32 %v155
    %vm163 = vmor %vm161, %vm162
    %v164 = vsel %vm163, %v155, %v160
    %v165 = vmul.f32 %v153, %v164
    %v166 = vmax.f32 %v165, 0.0
    %v167 = vtanh.pop %v166
    %168 = vst.msk [vmem:[#allocation5] sm:$0xff] %vm132, %v167
    // Predicated region
    $region18: #{recursive_representation_forward.1} parent=1 // pred_check
      _
    $region19: #{recursive_representation_forward.1} parent=1 // pred_check_branch
      %170 = sbr.rel (0) target = $region21
    $region20: #{recursive_representation_forward.1} parent=1 // pred_region
      %172 = vsyncadd [#allocation4], 0
      %s174 = sshll.u32 [#allocation5], 4
      %s175 = int_to_ptr.vmem [resolvable:$true] %s174
      %s176 = sshll.u32 %s3, 4
      %s177 = int_to_ptr.hbm [resolvable:$true] %s176
      %179 = dma.vmem_to_hbm [thread:$0]  %s175, 128, %s177, [#allocation4]
    $region21: #{recursive_representation_forward.1} parent=1 // pred_fallthru
      _
    // Predicated region
    $region22: #{recursive_representation_forward.1} parent=1 // pred_check
      _
    $region23: #{recursive_representation_forward.1} parent=1 // pred_check_branch
      %181 = sbr.rel (0) target = $region25
    $region24: #{recursive_representation_forward.1} parent=1 // pred_region
      %183 = dma.done [#allocation4], 128
    $region25: #{recursive_representation_forward.1} parent=1 // pred_fallthru
      _
    %184 = vsyncpa [#allocation3], 1
    %185 = vsyncpa [#allocation4], 1

</llo_original>
